<compile_context>
chip_gen: v7x
topology: tpu7x:2x2x1
jax: 0.10.0
libtpu: 0.0.40
codegen_flags: <defaults>
</compile_context>

<pallas_src>
import functools
import math

import jax
import jax.numpy as jnp
from jax import lax
from jax.experimental import pallas as pl
from jax.experimental.pallas import tpu as pltpu


def _round_up(x, m):
    return ((x + m - 1) // m) * m


def _vad_mlp_kernel(x_ref, w1_ref, b1_ref, w2_ref, b2_ref, thr_ref, o_ref, *,
                    frames_per_tile):
    """relu(x@W1+b1) @ W2 + b2 -> log_softmax, with fused pad-length mask."""
    # ---- per-frame MLP head (bf16 inputs, f32 accumulation) -------------
    x = x_ref[...]                                                    # (tR, D)
    h = jnp.dot(x, w1_ref[...], preferred_element_type=jnp.float32)  # (tR, H)
    h = jnp.maximum(h + b1_ref[...], 0.0)                            # ReLU
    logits = jnp.dot(h, w2_ref[...],
                     preferred_element_type=jnp.float32) + b2_ref[...]  # (tR, C)

    # ---- numerically-stable log-softmax over the class axis -------------
    m = jnp.max(logits, axis=-1, keepdims=True)
    z = logits - m
    lse = jnp.log(jnp.sum(jnp.exp(z), axis=-1, keepdims=True))
    out = z - lse                                                     # (tR, C)

    # ---- fused pad_packed_sequence mask ----------------------------------
    # Row r of tile i is frame t = i*F + r//B of batch b = r%B.  The wrapper
    # precomputes thresh[r] = lengths[r%B] - r//B (identical for every tile),
    # so "t < lengths[b]"  <=>  i*F < thresh[r]: one scalar-vs-vector compare.
    t0 = pl.program_id(0) * frames_per_tile
    keep = t0 < thr_ref[...]                                          # (tR, 1)
    o_ref[...] = jnp.where(keep, out, 0.0).astype(o_ref.dtype)


def vad_forward_padded(feat, w1, b1, w2, b2, lengths=None, *,
                       row_tile=512, compute_dtype=jnp.bfloat16):
    """JAX/Pallas equivalent of VoiceActivityDetectorTorchModel.forward_padded.

    Args:
      feat:    (L, B, D) float32, time-major padded features.
      w1, b1:  (D, H), (1, H)   first Linear (W stored as (in, out)).
      w2, b2:  (H, C), (1, C)   output Linear.
      lengths: optional (B,) int sequence lengths (zeros promoted to 1, like
               `lengths[lengths == 0] = 1` in the reference).
    Returns:
      (L, B, C) float32 padded log-likelihood sequences (zero past lengths).
    """
    L, B, D = feat.shape
    H = w1.shape[1]
    C = w2.shape[1]

    if lengths is None:
        lengths = jnp.full((B,), L, dtype=jnp.int32)
    lengths = jnp.maximum(lengths.astype(jnp.int32), 1)

    # ---- glue: flatten (L, B, D) -> (R, D) rows, cast dominant stream ----
    R = L * B
    x2d = feat.reshape(R, D).astype(compute_dtype)
    w1c = w1.astype(compute_dtype)
    b1c = b1.astype(jnp.float32)
    w2c = w2.astype(jnp.float32)
    b2c = b2.astype(jnp.float32)

    # Row tile: as large as is useful (amortizes ~0.35us/step overhead, big
    # DMAs), multiple of 8 (sublanes) and of B (whole frames per tile so the
    # pad mask is tile-invariant).
    unit = (8 * B) // math.gcd(8, B)
    rt = _round_up(max(row_tile, unit), unit)
    rt = min(rt, _round_up(R, unit))
    n_tiles = pl.cdiv(R, rt)
    if n_tiles < 2 and rt >= 2 * unit:
        # Keep >=2 grid steps so the ("parallel",) axis can be split across
        # both TensorCores on v7x.
        rt = _round_up(pl.cdiv(rt, 2), unit)
        n_tiles = pl.cdiv(R, rt)
    row_tile = rt
    frames_per_tile = row_tile // B

    # Per-row mask thresholds (same for every tile; stays resident in VMEM):
    #   thresh[r] = lengths[r % B] - r // B
    r_idx = jnp.arange(row_tile, dtype=jnp.int32)
    thresh = (lengths[r_idx % B] - (r_idx // B)).reshape(row_tile, 1)

    x_bytes = jnp.dtype(compute_dtype).itemsize
    flops = 2 * R * (D * H + H * C)
    transcendentals = R * C + R                       # exp per class + log
    bytes_accessed = (R * D * x_bytes + R * C * 4 + D * H * x_bytes
                      + (H + H * C + C) * 4 + row_tile * 4)
    vmem_needed = (2 * row_tile * D * x_bytes         # double-buffered x tile
                   + 2 * row_tile * C * 4             # double-buffered out
                   + D * H * x_bytes + (H + H * C + C + row_tile) * 4)
    vmem_limit = int(min(max(2 * vmem_needed, 32 * 1024 * 1024),
                         48 * 1024 * 1024))

    grid_spec = pltpu.PrefetchScalarGridSpec(
        num_scalar_prefetch=0,
        grid=(n_tiles,),
        in_specs=[
            pl.BlockSpec((row_tile, D), lambda i: (i, 0)),   # x rows (stream)
            pl.BlockSpec((D, H), lambda i: (0, 0)),          # W1 (resident)
            pl.BlockSpec((1, H), lambda i: (0, 0)),          # b1
            pl.BlockSpec((H, C), lambda i: (0, 0)),          # W2
            pl.BlockSpec((1, C), lambda i: (0, 0)),          # b2
            pl.BlockSpec((row_tile, 1), lambda i: (0, 0)),   # mask thresholds
        ],
        out_specs=pl.BlockSpec((row_tile, C), lambda i: (i, 0)),
    )

    out2d = pl.pallas_call(
        functools.partial(_vad_mlp_kernel, frames_per_tile=frames_per_tile),
        out_shape=jax.ShapeDtypeStruct((R, C), jnp.float32),
        grid_spec=grid_spec,
        compiler_params=pltpu.CompilerParams(
            dimension_semantics=("parallel",),
            vmem_limit_bytes=vmem_limit),
        cost_estimate=pl.CostEstimate(flops=flops,
                                      transcendentals=transcendentals,
                                      bytes_accessed=bytes_accessed),
    )(x2d, w1c, b1c, w2c, b2c, thresh)

    # TODO(synk): PackedSequence pack/unpack bookkeeping itself has no Pallas
    # equivalent; it reduces to the length mask fused into the kernel above.
    return out2d.reshape(L, B, C)


def _torch_style_ref(feat, w1, b1, w2, b2, lengths, compute_dtype=jnp.bfloat16):
    """Pure-JAX reference (same bf16 input rounding) for correctness check."""
    lengths = jnp.maximum(lengths.astype(jnp.int32), 1)
    x = feat.astype(compute_dtype).astype(jnp.float32)
    w1f = w1.astype(compute_dtype).astype(jnp.float32)
    h = jnp.maximum(
        jnp.einsum("lbd,dh->lbh", x, w1f,
                   precision=lax.Precision.HIGHEST) + b1[0], 0.0)
    logits = jnp.einsum("lbh,hc->lbc", h, w2,
                        precision=lax.Precision.HIGHEST) + b2[0]
    out = jax.nn.log_softmax(logits, axis=-1)
    mask = (jnp.arange(feat.shape[0])[:, None] < lengths[None, :])[..., None]
    return jnp.where(mask, out, 0.0)


if __name__ == "__main__":
    # Small shapes consistent with forward_padded: (length, num_batches, dim)
    L, B, D = 16, 2, 32      # seq length, batch, feature dim
    H, C = 32, 2             # hidden units, VAD classes (voiced / unvoiced)

    key = jax.random.PRNGKey(0)
    k_feat, k_w1, k_b1, k_w2, k_b2 = jax.random.split(key, 5)

    feat = jax.random.normal(k_feat, (L, B, D), dtype=jnp.float32)
    w1 = jax.random.normal(k_w1, (D, H), dtype=jnp.float32) * 0.1
    b1 = jax.random.normal(k_b1, (1, H), dtype=jnp.float32) * 0.1
    w2 = jax.random.normal(k_w2, (H, C), dtype=jnp.float32) * 0.1
    b2 = jax.random.normal(k_b2, (1, C), dtype=jnp.float32) * 0.1

    # (1) lengths=None branch of forward_padded -> full lengths.
    out_full = jax.block_until_ready(vad_forward_padded(feat, w1, b1, w2, b2))
    ref_full = _torch_style_ref(feat, w1, b1, w2, b2,
                                jnp.full((B,), L, dtype=jnp.int32))
    assert out_full.shape == (L, B, C), out_full.shape
    assert jnp.allclose(out_full, ref_full, atol=1e-3, rtol=1e-3), \
        "mismatch vs reference (full lengths)"

    # (2) ragged lengths, including a zero (promoted to 1 like the PyTorch code).
    lengths = jnp.array([L - 5, 0], dtype=jnp.int32)
    out_rag = jax.block_until_ready(
        vad_forward_padded(feat, w1, b1, w2, b2, lengths=lengths))
    ref_rag = _torch_style_ref(feat, w1, b1, w2, b2, lengths)
    assert jnp.allclose(out_rag, ref_rag, atol=1e-3, rtol=1e-3), \
        "mismatch vs reference (ragged lengths)"

    print("KERNEL_OK")
</pallas_src>

<mosaic_0001>
module attributes {stable_mosaic.version = 11 : i64} {
  func.func @_vad_mlp_kernel(%arg0: i32, %arg1: memref<16x32xbf16, #tpu.memory_space<vmem>>, %arg2: memref<32x32xbf16, #tpu.memory_space<vmem>>, %arg3: memref<1x32xf32, #tpu.memory_space<vmem>>, %arg4: memref<32x2xf32, #tpu.memory_space<vmem>>, %arg5: memref<1x2xf32, #tpu.memory_space<vmem>>, %arg6: memref<16x1xi32, #tpu.memory_space<vmem>>, %arg7: memref<16x2xf32, #tpu.memory_space<vmem>>) attributes {dimension_semantics = [#tpu.dimension_semantics<parallel>], iteration_bounds = array<i64: 2>, scalar_prefetch = 0 : i64, scratch_operands = 0 : i64, tpu.core_type = #tpu.core_type<tc>, window_params = [{transform_indices = @transform_0, window_bounds = array<i64: 16, 32>}, {pipeline_mode = #tpu.pipeline_mode<synchronous>, transform_indices = @transform_1, window_bounds = array<i64: 32, 32>}, {pipeline_mode = #tpu.pipeline_mode<synchronous>, transform_indices = @transform_2, window_bounds = array<i64: 1, 32>}, {pipeline_mode = #tpu.pipeline_mode<synchronous>, transform_indices = @transform_3, window_bounds = array<i64: 32, 2>}, {pipeline_mode = #tpu.pipeline_mode<synchronous>, transform_indices = @transform_4, window_bounds = array<i64: 1, 2>}, {pipeline_mode = #tpu.pipeline_mode<synchronous>, transform_indices = @transform_5, window_bounds = array<i64: 16, 1>}, {transform_indices = @transform_6, window_bounds = array<i64: 16, 2>}]} {
    %c0 = arith.constant 0 : index
    %c0_0 = arith.constant 0 : index
    %0 = vector.load %arg1[%c0, %c0_0] : memref<16x32xbf16, #tpu.memory_space<vmem>>, vector<16x32xbf16>
    %c0_1 = arith.constant 0 : index
    %c0_2 = arith.constant 0 : index
    %1 = vector.load %arg2[%c0_1, %c0_2] : memref<32x32xbf16, #tpu.memory_space<vmem>>, vector<32x32xbf16>
    %cst = arith.constant dense<0.000000e+00> : vector<16x32xf32>
    %2 = tpu.matmul %0, %1, %cst {dimension_numbers = #tpu.dot_dimension_numbers<[1], [0], [0], [1], [0, 0, 1, 1], [], []>} : vector<16x32xbf16>, vector<32x32xbf16>, vector<16x32xf32> -> vector<16x32xf32>
    %c0_3 = arith.constant 0 : index
    %c0_4 = arith.constant 0 : index
    %3 = vector.load %arg3[%c0_3, %c0_4] : memref<1x32xf32, #tpu.memory_space<vmem>>, vector<1x32xf32>
    %4 = vector.broadcast %3 : vector<1x32xf32> to vector<16x32xf32>
    %5 = arith.addf %2, %4 : vector<16x32xf32>
    %cst_5 = arith.constant 0.000000e+00 : f32
    %6 = vector.broadcast %cst_5 : f32 to vector<16x32xf32>
    %7 = arith.maximumf %5, %6 : vector<16x32xf32>
    %c0_6 = arith.constant 0 : index
    %c0_7 = arith.constant 0 : index
    %8 = vector.load %arg4[%c0_6, %c0_7] : memref<32x2xf32, #tpu.memory_space<vmem>>, vector<32x2xf32>
    %cst_8 = arith.constant dense<0.000000e+00> : vector<16x2xf32>
    %9 = tpu.matmul %7, %8, %cst_8 {dimension_numbers = #tpu.dot_dimension_numbers<[1], [0], [0], [1], [0, 0, 1, 1], [], []>} : vector<16x32xf32>, vector<32x2xf32>, vector<16x2xf32> -> vector<16x2xf32>
    %c0_9 = arith.constant 0 : index
    %c0_10 = arith.constant 0 : index
    %10 = vector.load %arg5[%c0_9, %c0_10] : memref<1x2xf32, #tpu.memory_space<vmem>>, vector<1x2xf32>
    %11 = vector.broadcast %10 : vector<1x2xf32> to vector<16x2xf32>
    %12 = arith.addf %9, %11 : vector<16x2xf32>
    %cst_11 = arith.constant dense<0xFF800000> : vector<16xf32>
    %13 = vector.multi_reduction <maximumf>, %12, %cst_11 [1] : vector<16x2xf32> to vector<16xf32>
    %14 = vector.shape_cast %13 : vector<16xf32> to vector<16x1xf32>
    %15 = vector.broadcast %14 : vector<16x1xf32> to vector<16x2xf32>
    %16 = arith.subf %12, %15 : vector<16x2xf32>
    %17 = math.exp %16 : vector<16x2xf32>
    %cst_12 = arith.constant dense<0.000000e+00> : vector<16xf32>
    %18 = vector.multi_reduction <add>, %17, %cst_12 [1] : vector<16x2xf32> to vector<16xf32>
    %19 = vector.shape_cast %18 : vector<16xf32> to vector<16x1xf32>
    %20 = math.log %19 : vector<16x1xf32>
    %21 = vector.broadcast %20 : vector<16x1xf32> to vector<16x2xf32>
    %22 = arith.subf %16, %21 : vector<16x2xf32>
    %c8_i32 = arith.constant 8 : i32
    %23 = arith.muli %arg0, %c8_i32 : i32
    %c0_13 = arith.constant 0 : index
    %c0_14 = arith.constant 0 : index
    %24 = vector.load %arg6[%c0_13, %c0_14] : memref<16x1xi32, #tpu.memory_space<vmem>>, vector<16x1xi32>
    %25 = vector.broadcast %23 : i32 to vector<16x1xi32>
    %26 = arith.cmpi slt, %25, %24 : vector<16x1xi32>
    %cst_15 = arith.constant 0.000000e+00 : f32
    %27 = vector.shape_cast %26 : vector<16x1xi1> to vector<16x1xi1>
    %28 = vector.broadcast %27 : vector<16x1xi1> to vector<16x2xi1>
    %29 = vector.broadcast %cst_15 : f32 to vector<16x2xf32>
    %30 = arith.select %28, %22, %29 : vector<16x2xi1>, vector<16x2xf32>
    %c0_16 = arith.constant 0 : index
    %c0_17 = arith.constant 0 : index
    %31 = vector.load %arg7[%c0_16, %c0_17] : memref<16x2xf32, #tpu.memory_space<vmem>>, vector<16x2xf32>
    tpu.vector_store %arg7[%c0_16, %c0_17], %30 {strides = array<i32>} : memref<16x2xf32, #tpu.memory_space<vmem>>, vector<16x2xf32>,
    return
  }
  func.func @transform_0(%arg0: i32) -> (i32, i32) {
    %c0_i32 = arith.constant 0 : i32
    %c0_i32_0 = arith.constant 0 : i32
    return %arg0, %c0_i32 : i32, i32
  }
  func.func @transform_1(%arg0: i32) -> (i32, i32) {
    %c0_i32 = arith.constant 0 : i32
    %c0_i32_0 = arith.constant 0 : i32
    %c0_i32_1 = arith.constant 0 : i32
    return %c0_i32, %c0_i32_0 : i32, i32
  }
  func.func @transform_2(%arg0: i32) -> (i32, i32) {
    %c0_i32 = arith.constant 0 : i32
    %c0_i32_0 = arith.constant 0 : i32
    %c0_i32_1 = arith.constant 0 : i32
    return %c0_i32, %c0_i32_0 : i32, i32
  }
  func.func @transform_3(%arg0: i32) -> (i32, i32) {
    %c0_i32 = arith.constant 0 : i32
    %c0_i32_0 = arith.constant 0 : i32
    %c0_i32_1 = arith.constant 0 : i32
    return %c0_i32, %c0_i32_0 : i32, i32
  }
  func.func @transform_4(%arg0: i32) -> (i32, i32) {
    %c0_i32 = arith.constant 0 : i32
    %c0_i32_0 = arith.constant 0 : i32
    %c0_i32_1 = arith.constant 0 : i32
    return %c0_i32, %c0_i32_0 : i32, i32
  }
  func.func @transform_5(%arg0: i32) -> (i32, i32) {
    %c0_i32 = arith.constant 0 : i32
    %c0_i32_0 = arith.constant 0 : i32
    %c0_i32_1 = arith.constant 0 : i32
    return %c0_i32, %c0_i32_0 : i32, i32
  }
  func.func @transform_6(%arg0: i32) -> (i32, i32) {
    %c0_i32 = arith.constant 0 : i32
    %c0_i32_0 = arith.constant 0 : i32
    return %arg0, %c0_i32 : i32, i32
  }
}

</mosaic_0001>

<llo_original>
// kernel: tpu_custom_call.1
$region0: #{tpu_custom_call.1}
  #allocation0 [shape = 'u32[]', space=smem, size = 0x4, offset = 0x4, fixed_abs, tag = 'smem constant byte address 0x4 - core index']
  #allocation1 [shape = 'u32[144,128]{1,0:T(1,128)}', space=vmem, size = 0x12000, scoped, tag = 'internal scratch']
  %s0 = inlined_call_operand.vmem [shape: bf16[32,32], index: 0, kind: input, shape index: {}]
  %s1 = inlined_call_operand.vmem [shape: bf16[32,32], index: 1, kind: input, shape index: {}]
  %s2 = inlined_call_operand.vmem [shape: f32[1,32], index: 2, kind: input, shape index: {}]
  %s3 = inlined_call_operand.vmem [shape: f32[32,2], index: 3, kind: input, shape index: {}]
  %s4 = inlined_call_operand.vmem [shape: f32[1,2], index: 4, kind: input, shape index: {}]
  %s5 = inlined_call_operand.vmem [shape: s32[16,1], index: 5, kind: input, shape index: {}]
  %s6 = inlined_call_operand.vmem [shape: f32[32,2], index: 6, kind: output, shape index: {}]
  %s7 = sld [smem:[#allocation0]]
  $region57: #{tpu_custom_call.1} parent=0
    _
  %s9 = ssub.s32 1, %s7
  %s10 = scalar_select 0, %s9, %s7
  loop: start=0, step=1, limit=4
  $region2: #{tpu_custom_call.1} parent=0 // loop_pre_header
    _
  $region3: #{tpu_custom_call.1} parent=0 // loop_header
    %s12 = sphi 0, %s16
    %p13 = scmp.ge.s32.totalorder %s12, 4
    %s22 = sphi 0, %s24
    %s25 = sphi 0, %s22
    %s26 = sphi 0, %s25
    %s42 = sphi 0, %s26
    %s46 = sphi 0, %s46
    %s48 = sphi 0, %s46
    %s49 = sphi 0, %s48
    %s63 = sphi 0, %s49
    %s67 = sphi 0, %s67
    %s69 = sphi 0, %s67
    %s70 = sphi 0, %s69
    %s84 = sphi 0, %s70
    %s88 = sphi 0, %s88
    %s90 = sphi 0, %s88
    %s91 = sphi 0, %s90
    %s105 = sphi 0, %s91
    %s109 = sphi 0, %s109
    %s111 = sphi 0, %s109
    %s112 = sphi 0, %s111
    %s126 = sphi 0, %s112
    %s130 = sphi 0, %s130
    %s132 = sphi 0, %s130
    %s133 = sphi 0, %s132
    %s147 = sphi 0, %s133
    %s153 = sphi 0, %s155
    %s156 = sphi 0, %s153
    %s157 = sphi 0, %s156
    %s173 = sphi 0, %s157
  $region4: #{tpu_custom_call.1} parent=0 // loop_header_branch
    %15 = sbr.rel (%p13) target = $region8
  $region5: #{tpu_custom_call.1} parent=0 // loop_body
    %s17 = ssub.s32 %s12, 1
    %s18 = ssub.s32 %s12, 2
    %s19 = sadd.s32 %s12, 1
    %s20 = ssub.s32 %s12, %s19
    %p21 = scmp.eq.s32.totalorder %s20, 0
    %s23 = sadd.s32 %s22, 1
    %s24 = scalar_select %p21, %s22, %s23
    %p27 = pneg %p21
    %p28 = scmp.eq.s32.totalorder %s12, 1
    %p29 = por %p27, %p28
    %p30 = scmp.ne.s32.totalorder %s22, %s25
    %p31 = scmp.eq.s32.totalorder %s12, 0
    %p32 = por %p30, %p31
    %p33 = scmp.ne.s32.totalorder %s22, %s25
    %p34 = scmp.eq.s32.totalorder %s17, 1
    %p35 = por %p33, %p34
    %p36 = scmp.ne.s32.totalorder %s25, %s26
    %p37 = scmp.eq.s32.totalorder %s17, 0
    %p38 = por %p36, %p37
    %p39 = scmp.ne.s32.totalorder %s25, %s26
    %p40 = scmp.eq.s32.totalorder %s18, 1
    %p41 = por %p39, %p40
    %p43 = scmp.ne.s32.totalorder %s26, %s42
    %p44 = scmp.eq.s32.totalorder %s18, 0
    %p45 = por %p43, %p44
    %s47 = sadd.s32 %s46, 1
    %p50 = scmp.eq.s32.totalorder %s12, 1
    %p51 = scmp.ne.s32.totalorder %s46, %s48
    %p52 = scmp.eq.s32.totalorder %s12, 0
    %p53 = por %p51, %p52
    %p54 = scmp.ne.s32.totalorder %s46, %s48
    %p55 = scmp.eq.s32.totalorder %s17, 1
    %p56 = por %p54, %p55
    %p57 = scmp.ne.s32.totalorder %s48, %s49
    %p58 = scmp.eq.s32.totalorder %s17, 0
    %p59 = por %p57, %p58
    %p60 = scmp.ne.s32.totalorder %s48, %s49
    %p61 = scmp.eq.s32.totalorder %s18, 1
    %p62 = por %p60, %p61
    %p64 = scmp.ne.s32.totalorder %s49, %s63
    %p65 = scmp.eq.s32.totalorder %s18, 0
    %p66 = por %p64, %p65
    %s68 = sadd.s32 %s67, 1
    %p71 = scmp.eq.s32.totalorder %s12, 1
    %p72 = scmp.ne.s32.totalorder %s67, %s69
    %p73 = scmp.eq.s32.totalorder %s12, 0
    %p74 = por %p72, %p73
    %p75 = scmp.ne.s32.totalorder %s67, %s69
    %p76 = scmp.eq.s32.totalorder %s17, 1
    %p77 = por %p75, %p76
    %p78 = scmp.ne.s32.totalorder %s69, %s70
    %p79 = scmp.eq.s32.totalorder %s17, 0
    %p80 = por %p78, %p79
    %p81 = scmp.ne.s32.totalorder %s69, %s70
    %p82 = scmp.eq.s32.totalorder %s18, 1
    %p83 = por %p81, %p82
    %p85 = scmp.ne.s32.totalorder %s70, %s84
    %p86 = scmp.eq.s32.totalorder %s18, 0
    %p87 = por %p85, %p86
    %s89 = sadd.s32 %s88, 1
    %p92 = scmp.eq.s32.totalorder %s12, 1
    %p93 = scmp.ne.s32.totalorder %s88, %s90
    %p94 = scmp.eq.s32.totalorder %s12, 0
    %p95 = por %p93, %p94
    %p96 = scmp.ne.s32.totalorder %s88, %s90
    %p97 = scmp.eq.s32.totalorder %s17, 1
    %p98 = por %p96, %p97
    %p99 = scmp.ne.s32.totalorder %s90, %s91
    %p100 = scmp.eq.s32.totalorder %s17, 0
    %p101 = por %p99, %p100
    %p102 = scmp.ne.s32.totalorder %s90, %s91
    %p103 = scmp.eq.s32.totalorder %s18, 1
    %p104 = por %p102, %p103
    %p106 = scmp.ne.s32.totalorder %s91, %s105
    %p107 = scmp.eq.s32.totalorder %s18, 0
    %p108 = por %p106, %p107
    %s110 = sadd.s32 %s109, 1
    %p113 = scmp.eq.s32.totalorder %s12, 1
    %p114 = scmp.ne.s32.totalorder %s109, %s111
    %p115 = scmp.eq.s32.totalorder %s12, 0
    %p116 = por %p114, %p115
    %p117 = scmp.ne.s32.totalorder %s109, %s111
    %p118 = scmp.eq.s32.totalorder %s17, 1
    %p119 = por %p117, %p118
    %p120 = scmp.ne.s32.totalorder %s111, %s112
    %p121 = scmp.eq.s32.totalorder %s17, 0
    %p122 = por %p120, %p121
    %p123 = scmp.ne.s32.totalorder %s111, %s112
    %p124 = scmp.eq.s32.totalorder %s18, 1
    %p125 = por %p123, %p124
    %p127 = scmp.ne.s32.totalorder %s112, %s126
    %p128 = scmp.eq.s32.totalorder %s18, 0
    %p129 = por %p127, %p128
    %s131 = sadd.s32 %s130, 1
    %p134 = scmp.eq.s32.totalorder %s12, 1
    %p135 = scmp.ne.s32.totalorder %s130, %s132
    %p136 = scmp.eq.s32.totalorder %s12, 0
    %p137 = por %p135, %p136
    %p138 = scmp.ne.s32.totalorder %s130, %s132
    %p139 = scmp.eq.s32.totalorder %s17, 1
    %p140 = por %p138, %p139
    %p141 = scmp.ne.s32.totalorder %s132, %s133
    %p142 = scmp.eq.s32.totalorder %s17, 0
    %p143 = por %p141, %p142
    %p144 = scmp.ne.s32.totalorder %s132, %s133
    %p145 = scmp.eq.s32.totalorder %s18, 1
    %p146 = por %p144, %p145
    %p148 = scmp.ne.s32.totalorder %s133, %s147
    %p149 = scmp.eq.s32.totalorder %s18, 0
    %p150 = por %p148, %p149
    %s151 = ssub.s32 %s12, %s19
    %p152 = scmp.eq.s32.totalorder %s151, 0
    %s154 = sadd.s32 %s153, 1
    %s155 = scalar_select %p152, %s153, %s154
    %p158 = pneg %p152
    %p159 = scmp.eq.s32.totalorder %s12, 1
    %p160 = por %p158, %p159
    %p161 = scmp.ne.s32.totalorder %s153, %s156
    %p162 = scmp.eq.s32.totalorder %s12, 0
    %p163 = por %p161, %p162
    %p164 = scmp.ne.s32.totalorder %s153, %s156
    %p165 = scmp.eq.s32.totalorder %s17, 1
    %p166 = por %p164, %p165
    %p167 = scmp.ne.s32.totalorder %s156, %s157
    %p168 = scmp.eq.s32.totalorder %s17, 0
    %p169 = por %p167, %p168
    %p170 = scmp.ne.s32.totalorder %s156, %s157
    %p171 = scmp.eq.s32.totalorder %s18, 1
    %p172 = por %p170, %p171
    %p174 = scmp.ne.s32.totalorder %s157, %s173
    %p175 = scmp.eq.s32.totalorder %s18, 0
    %p176 = por %p174, %p175
    %p177 = scmp.le.s32.totalorder 1, %s12
    %p178 = scmp.lt.s32.totalorder %s12, 3
    %p179 = pnand %p177, %p178
    %p180 = pneg %p179
    // Predicated region
    $region9: #{tpu_custom_call.1} parent=5 // pred_check
      _
    $region10: #{tpu_custom_call.1} parent=5 // pred_check_branch
      %182 = sbr.rel (%p179) target = $region12
    $region11: #{tpu_custom_call.1} parent=5 // pred_region
      %s183 = ssub.s32 %s12, 1
      // Predicated region
      $region13: #{tpu_custom_call.1} parent=11 // pred_check
        %p184 = pneg %p59
      $region14: #{tpu_custom_call.1} parent=11 // pred_check_branch
        %186 = sbr.rel (%p184) target = $region16
      $region15: #{tpu_custom_call.1} parent=11 // pred_region
        _
      $region16: #{tpu_custom_call.1} parent=11 // pred_fallthru
        _
      // Predicated region
      $region17: #{tpu_custom_call.1} parent=11 // pred_check
        %p187 = pneg %p80
      $region18: #{tpu_custom_call.1} parent=11 // pred_check_branch
        %189 = sbr.rel (%p187) target = $region20
      $region19: #{tpu_custom_call.1} parent=11 // pred_region
        _
      $region20: #{tpu_custom_call.1} parent=11 // pred_fallthru
        _
      // Predicated region
      $region21: #{tpu_custom_call.1} parent=11 // pred_check
        %p190 = pneg %p101
      $region22: #{tpu_custom_call.1} parent=11 // pred_check_branch
        %192 = sbr.rel (%p190) target = $region24
      $region23: #{tpu_custom_call.1} parent=11 // pred_region
        _
      $region24: #{tpu_custom_call.1} parent=11 // pred_fallthru
        _
      // Predicated region
      $region25: #{tpu_custom_call.1} parent=11 // pred_check
        %p193 = pneg %p122
      $region26: #{tpu_custom_call.1} parent=11 // pred_check_branch
        %195 = sbr.rel (%p193) target = $region28
      $region27: #{tpu_custom_call.1} parent=11 // pred_region
        _
      $region28: #{tpu_custom_call.1} parent=11 // pred_fallthru
        _
      // Predicated region
      $region29: #{tpu_custom_call.1} parent=11 // pred_check
        %p196 = pneg %p143
      $region30: #{tpu_custom_call.1} parent=11 // pred_check_branch
        %198 = sbr.rel (%p196) target = $region32
      $region31: #{tpu_custom_call.1} parent=11 // pred_region
        _
      $region32: #{tpu_custom_call.1} parent=11 // pred_fallthru
        _
    $region12: #{tpu_custom_call.1} parent=5 // pred_fallthru
      _
    %p199 = scmp.lt.s32.totalorder %s12, 2
    // Predicated region
    $region33: #{tpu_custom_call.1} parent=5 // pred_check
      %p200 = pneg %p199
    $region34: #{tpu_custom_call.1} parent=5 // pred_check_branch
      %202 = sbr.rel (%p200) target = $region36
    $region35: #{tpu_custom_call.1} parent=5 // pred_region
      // Predicated region
      $region37: #{tpu_custom_call.1} parent=35 // pred_check
        %p203 = pneg %p32
      $region38: #{tpu_custom_call.1} parent=35 // pred_check_branch
        %205 = sbr.rel (%p203) target = $region40
      $region39: #{tpu_custom_call.1} parent=35 // pred_region
        %s206 = smul.u32 2, %s12
        %p207 = scmp.lt.s32.totalorder %s206, 3
        %s208 = scalar_select %p207, %s206, 3
        %s209 = smul.addr %s208, 4
        %s210 = scalar_lea.vmem %s0, %s209
        %s211 = smul.u32 2, %s12
      $region40: #{tpu_custom_call.1} parent=35 // pred_fallthru
        _
    $region36: #{tpu_custom_call.1} parent=5 // pred_fallthru
      _
    %p212 = scmp.le.s32.totalorder 1, %s12
    %p213 = scmp.lt.s32.totalorder %s12, 3
    %p214 = pnand %p212, %p213
    %p215 = pneg %p214
    // Predicated region
    $region41: #{tpu_custom_call.1} parent=5 // pred_check
      _
    $region42: #{tpu_custom_call.1} parent=5 // pred_check_branch
      %217 = sbr.rel (%p214) target = $region44
    $region43: #{tpu_custom_call.1} parent=5 // pred_region
      %s218 = ssub.s32 %s12, 1
      %s219 = smul.u32 2, %s17
      %p220 = scmp.lt.s32.totalorder %s219, 3
      %s221 = scalar_select %p220, %s219, 3
      %s222 = smul.addr %s221, 4
      %s223 = scalar_lea.vmem %s0, %s222
      %p224 = pneg %p38
      %p225 = pneg %p35
      %p226 = pneg %p59
      %p227 = pneg %p56
      %p228 = pneg %p80
      %p229 = pneg %p77
      %p230 = pneg %p101
      %p231 = pneg %p98
      %p232 = pneg %p122
      %p233 = pneg %p119
      %p234 = pneg %p143
      %p235 = pneg %p140
      %p236 = pneg %p169
      %p237 = pneg %p166
      %s238 = smul.u32 2, %s17
      %p239 = scmp.lt.s32.totalorder %s238, 3
      %s240 = scalar_select %p239, %s238, 3
      %s241 = smul.addr %s240, 8
      %s242 = scalar_lea.vmem %s6, %s241
      %s243 = smul.u32 2, %s17
      %p244 = scmp.lt.s32.totalorder %s243, 3
      %s245 = scalar_select %p244, %s243, 3
      %s246 = smul.addr %s245, 4
      %s247 = scalar_lea.vmem %s0, %s246
      %s248 = smul.u32 2, %s17
      %s249 = smul.u32 2, %s17
      %p250 = scmp.lt.s32.totalorder %s249, 3
      %s251 = scalar_select %p250, %s249, 3
      %s252 = smul.addr %s251, 8
      %s253 = scalar_lea.vmem %s6, %s252
      %s254 = smul.u32 2, %s17
      %v256 = vld [vmem:[%s247] sm:$0xf]
      %v257 = vld [vmem:[%s247 + $0x4] sm:$0xf]
      %v258 = vld [vmem:[%s1] sm:$0xf]
      %v259 = vld [vmem:[%s1 + $0x4] sm:$0xf]
      %v260 = vld [vmem:[%s1 + $0x8] sm:$0xf]
      %v261 = vld [vmem:[%s1 + $0xc] sm:$0xf]
      %v262 = vld [vmem:[%s2] sm:$0x1]
      %v264 = vlaneseq
      %v265 = vshrl.u32 %v264, 7
      %v266 = vsub.s32 0, %v265
      %v267 = vrot.slane %v262, %v266
      %v271 = vunpack.c.l.b16 %v256
      %v272 = vunpack.c.l.b16 %v257
      %v273 = vpack.c.b16 %v272, %v271
      %v278 = vunpack.c.l.b16 %v258
      %v279 = vunpack.c.l.b16 %v259
      %v280 = vunpack.c.l.b16 %v260
      %v281 = vunpack.c.l.b16 %v261
      %v282 = vpack.c.b16 %v279, %v278
      %v283 = vpack.c.b16 %v281, %v280
      %vm286 = vcmask 261120
      %v288 = vsel %vm286, %v273, 0
      %290 = vmatprep.subr.bf16.mxu0 0
      %291 = vmatpush1.bf16.msra.mxu0 %v282
      %292 = vmatprep.subr.bf16.mxu0 0
      %293 = vmatpush1.bf16.msra.mxu0 %v283
      %294 = vmatprep.subr.bf16.mxu0 0
      %295 = vmatpush1.bf16.msra.mxu0 0
      %296 = vmatprep.subr.bf16.mxu0 0
      %297 = vmatpush1.bf16.msra.mxu0 0
      %298 = vmatprep.subr.bf16.mxu0 0
      %299 = vmatpush1.bf16.msra.mxu0 0
      %300 = vmatprep.subr.bf16.mxu0 0
      %301 = vmatpush1.bf16.msra.mxu0 0
      %302 = vmatprep.subr.bf16.mxu0 0
      %303 = vmatpush1.bf16.msra.mxu0 0
      %304 = vmatprep.subr.bf16.mxu0 0
      %305 = vmatpush1.bf16.msra.mxu0 0
      %306 = vmatprep.subr.bf16.mxu0 0
      %307 = vmatpush1.bf16.msra.mxu0 0
      %308 = vmatprep.subr.bf16.mxu0 0
      %309 = vmatpush1.bf16.msra.mxu0 0
      %310 = vmatprep.subr.bf16.mxu0 0
      %311 = vmatpush1.bf16.msra.mxu0 0
      %312 = vmatprep.subr.bf16.mxu0 0
      %313 = vmatpush1.bf16.msra.mxu0 0
      %314 = vmatprep.subr.bf16.mxu0 0
      %315 = vmatpush1.bf16.msra.mxu0 0
      %316 = vmatprep.subr.bf16.mxu0 0
      %317 = vmatpush1.bf16.msra.mxu0 0
      %318 = vmatprep.subr.bf16.mxu0 0
      %319 = vmatpush1.bf16.msra.mxu0 0
      %320 = vmatprep.subr.bf16.mxu0 0
      %321 = vmatpush1.bf16.msra.mxu0 0
      %322 = vmatprep.mubr.bf16.mxu0 0
      %323 = vmatmul.mubr.bf16.gmra.mrb[0].mxu0 %v288
      %v324 = vpop.f32.mrb[0].mxu0
      %v325 = vadd.f32 %v267, %v324
      %v326 = vpop.f32.mrb[0].mxu0
      %v327 = vpop.f32.mrb[0].mxu0
      %v328 = vadd.f32 %v267, %v327
      %v329 = vpop.f32.mrb[0].mxu0
      %330 = vdwg.mxu0
      %v331 = vmax.f32 %v325, 0.0
      %v332 = vmax.f32 %v328, 0.0
      %v333 = vld [vmem:[%s3] sm:$0xff]
      %v334 = vld [vmem:[%s3 + $0x8] sm:$0xff]
      %v335 = vld [vmem:[%s3 + $0x10] sm:$0xff]
      %v336 = vld [vmem:[%s3 + $0x18] sm:$0xff]
      %v337 = vld [vmem:[%s4] sm:$0x1]
      %v339 = vlaneseq
      %v340 = vshrl.u32 %v339, 7
      %v341 = vsub.s32 0, %v340
      %v342 = vrot.slane %v337, %v341
      %v345 = vsel %vm286, %v331, 0
      %v348 = vsel %vm286, %v332, 0
      %350 = vmatprep.subr.mxu0 0.0
      %351 = vmatpush1.msra.mxu0 %v333
      %352 = vmatprep.subr.mxu0 0.0
      %353 = vmatpush1.msra.mxu0 %v334
      %354 = vmatprep.subr.mxu0 0.0
      %355 = vmatpush1.msra.mxu0 %v335
      %356 = vmatprep.subr.mxu0 0.0
      %357 = vmatpush1.msra.mxu0 %v336
      %358 = vmatprep.subr.mxu0 0.0
      %359 = vmatpush1.msra.mxu0 0.0
      %360 = vmatprep.subr.mxu0 0.0
      %361 = vmatpush1.msra.mxu0 0.0
      %362 = vmatprep.subr.mxu0 0.0
      %363 = vmatpush1.msra.mxu0 0.0
      %364 = vmatprep.subr.mxu0 0.0
      %365 = vmatpush1.msra.mxu0 0.0
      %366 = vmatprep.subr.mxu0 0.0
      %367 = vmatpush1.msra.mxu0 0.0
      %368 = vmatprep.subr.mxu0 0.0
      %369 = vmatpush1.msra.mxu0 0.0
      %370 = vmatprep.subr.mxu0 0.0
      %371 = vmatpush1.msra.mxu0 0.0
      %372 = vmatprep.subr.mxu0 0.0
      %373 = vmatpush1.msra.mxu0 0.0
      %374 = vmatprep.subr.mxu0 0.0
      %375 = vmatpush1.msra.mxu0 0.0
      %376 = vmatprep.subr.mxu0 0.0
      %377 = vmatpush1.msra.mxu0 0.0
      %378 = vmatprep.subr.mxu0 0.0
      %379 = vmatpush1.msra.mxu0 0.0
      %380 = vmatprep.subr.mxu0 0.0
      %381 = vmatpush1.msra.mxu0 0.0
      %382 = vmatprep.subr.mxu0 0.0
      %383 = vmatpush1.msra.mxu0 0.0
      %384 = vmatprep.subr.mxu0 0.0
      %385 = vmatpush1.msra.mxu0 0.0
      %386 = vmatprep.subr.mxu0 0.0
      %387 = vmatpush1.msra.mxu0 0.0
      %388 = vmatprep.subr.mxu0 0.0
      %389 = vmatpush1.msra.mxu0 0.0
      %390 = vmatprep.subr.mxu0 0.0
      %391 = vmatpush1.msra.mxu0 0.0
      %392 = vmatprep.subr.mxu0 0.0
      %393 = vmatpush1.msra.mxu0 0.0
      %394 = vmatprep.subr.mxu0 0.0
      %395 = vmatpush1.msra.mxu0 0.0
      %396 = vmatprep.subr.mxu0 0.0
      %397 = vmatpush1.msra.mxu0 0.0
      %398 = vmatprep.subr.mxu0 0.0
      %399 = vmatpush1.msra.mxu0 0.0
      %400 = vmatprep.subr.mxu0 0.0
      %401 = vmatpush1.msra.mxu0 0.0
      %402 = vmatprep.subr.mxu0 0.0
      %403 = vmatpush1.msra.mxu0 0.0
      %404 = vmatprep.subr.mxu0 0.0
      %405 = vmatpush1.msra.mxu0 0.0
      %406 = vmatprep.subr.mxu0 0.0
      %407 = vmatpush1.msra.mxu0 0.0
      %408 = vmatprep.subr.mxu0 0.0
      %409 = vmatpush1.msra.mxu0 0.0
      %410 = vmatprep.subr.mxu0 0.0
      %411 = vmatpush1.msra.mxu0 0.0
      %412 = vmatprep.subr.mxu0 0.0
      %413 = vmatpush1.msra.mxu0 0.0
      %414 = vmatprep.mubr.f32.mxu0 0.0
      %415 = vmatmul.mubr.f32.gmra.mrb[0].mxu0 %v345
      %v416 = vpop.f32.mrb[0].mxu0
      %v417 = vadd.f32 %v342, %v416
      %v418 = vpop.f32.mrb[0].mxu0
      %419 = vmatprep.mubr.f32.mxu0 0.0
      %420 = vmatmul.mubr.f32.gmra.mrb[0].mxu0 %v348
      %v421 = vpop.f32.mrb[0].mxu0
      %v422 = vadd.f32 %v342, %v421
      %v423 = vpop.f32.mrb[0].mxu0
      %424 = vdwg.mxu0
      %vm425 = vcmask 15360
      %v426 = vsel %vm425, %v417, -inf
      %427 = vmax.xlane.f32.xlu0 %v426
      %v428 = vpop.xlane.xlu0 %427
      %v429 = vsel %vm425, %v422, -inf
      %430 = vmax.xlane.f32.xlu0 %v429
      %v431 = vpop.xlane.xlu0 %430
      %v432 = vsub.f32 %v417, %v428
      %v433 = vsub.f32 %v422, %v431
      %v434 = vmul.f32 %v432, 1.442695
      %v435 = vpow.pop %v434
      %v436 = vmul.f32 %v433, 1.442695
      %v437 = vpow.pop %v436
      %v438 = vsel %vm425, %v435, 0.0
      %439 = vadd.xlane.f32.xlu0 %v438
      %v440 = vpop.xlane.xlu0 %439
      %v441 = vsel %vm425, %v437, 0.0
      %442 = vadd.xlane.f32.xlu0 %v441
      %v443 = vpop.xlane.xlu0 %442
      %v444 = vlog2.pop %v440
      %v445 = vmul.f32 %v444, 0.6931472
      %v446 = vlog2.pop %v443
      %v447 = vmul.f32 %v446, 0.6931472
      %v448 = vsub.f32 %v432, %v445
      %v449 = vsub.f32 %v433, %v447
      %s450 = smul.u32 %s17, 8
      %v451 = vld [vmem:[%s5] sm:$0xff]
      %v452 = vld [vmem:[%s5 + $0x8] sm:$0xff]
      %v453 = vstv %s450
      %vm454 = vcmp.lt.s32.totalorder %v453, %v451
      %vm455 = vcmp.lt.s32.totalorder %v453, %v452
      %v456 = vsel %vm454, 1, 0
      %v457 = vsel %vm455, 1, 0
      %458 = vset.pattern.permute.xlu0 0
      %459 = vperm.xlu0 %458, %v456
      %v460 = vpop.permute.xlu0 %459
      %461 = vset.pattern.permute.xlu0 0
      %462 = vperm.xlu0 %461, %v457
      %v463 = vpop.permute.xlu0 %462
      %vm464 = vcmp.eq.s32.totalorder %v460, 1
      %vm465 = vcmp.eq.s32.totalorder %v463, 1
      %v466 = vsel %vm464, %v448, 0.0
      %v467 = vsel %vm465, %v449, 0.0
      %468 = vst.msk [vmem:[%s253] sm:$0xff] %vm425, %v466
      %469 = vst.msk [vmem:[%s253 + $0x8] sm:$0xff] %vm425, %v467
      %s470 = smul.u32 2, %s17
      %p471 = scmp.lt.s32.totalorder %s470, 3
      %s472 = scalar_select %p471, %s470, 3
      %s473 = smul.addr %s472, 8
      %s474 = scalar_lea.vmem %s6, %s473
      // Predicated region
      $region45: #{tpu_custom_call.1} parent=43 // pred_check
        %p475 = pneg %p166
      $region46: #{tpu_custom_call.1} parent=43 // pred_check_branch
        %477 = sbr.rel (%p475) target = $region48
      $region47: #{tpu_custom_call.1} parent=43 // pred_region
        %s478 = smul.u32 2, %s17
      $region48: #{tpu_custom_call.1} parent=43 // pred_fallthru
        _
    $region44: #{tpu_custom_call.1} parent=5 // pred_fallthru
      _
    %p479 = scmp.le.s32.totalorder 2, %s12
    // Predicated region
    $region49: #{tpu_custom_call.1} parent=5 // pred_check
      %p480 = pneg %p479
    $region50: #{tpu_custom_call.1} parent=5 // pred_check_branch
      %482 = sbr.rel (%p480) target = $region52
    $region51: #{tpu_custom_call.1} parent=5 // pred_region
      %s483 = ssub.s32 %s12, 2
      // Predicated region
      $region53: #{tpu_custom_call.1} parent=51 // pred_check
        %p484 = pneg %p172
      $region54: #{tpu_custom_call.1} parent=51 // pred_check_branch
        %486 = sbr.rel (%p484) target = $region56
      $region55: #{tpu_custom_call.1} parent=51 // pred_region
        %s487 = smul.u32 2, %s18
        %p488 = scmp.lt.s32.totalorder %s487, 3
        %s489 = scalar_select %p488, %s487, 3
        %s490 = smul.addr %s489, 8
        %s491 = scalar_lea.vmem %s6, %s490
      $region56: #{tpu_custom_call.1} parent=51 // pred_fallthru
        _
    $region52: #{tpu_custom_call.1} parent=5 // pred_fallthru
      _
  $region6: #{tpu_custom_call.1} parent=0 // loop_footer
    %s16 = sadd.s32 1, %s12
  $region7: #{tpu_custom_call.1} parent=0 // loop_footer_branch
    %11 = sbr.rel target = $region3
  $region8: #{tpu_custom_call.1} parent=0 // loop_exit
    _

</llo_original>
